<compile_context>
chip_gen: v7x
topology: tpu7x:2x2x1
jax: 0.10.0
libtpu: 0.0.40
codegen_flags: <defaults>
</compile_context>

<pallas_src>
import math

import jax
import jax.numpy as jnp
from jax.experimental import pallas as pl
from jax.experimental.pallas import tpu as pltpu


LANE = 128


def _round_up(x, m):
    return ((x + m - 1) // m) * m


def _physical_vmem_bytes():
    try:
        return int(pltpu.get_tpu_info().vmem_capacity_bytes)
    except Exception:
        return 64 * 1024 * 1024          # conservative default (v7x per-TC VMEM)


def _prefers_wide_tiles():
    # v6e / v7x have 2x256x256 MXUs -> feed 256-wide N tiles; v5e and older
    # have 128-wide MXUs, so 128 tiles are already optimal there.
    try:
        kind = jax.devices()[0].device_kind.lower()
    except Exception:
        return True
    return not any(g in kind for g in ("v2", "v3", "v4", "v5"))


def _sublane_multiple(dtype):
    # Sub-32-bit dtypes pack rows along sublanes: bf16 -> 16-row tiles,
    # int8/fp8 -> 32-row tiles.
    return {4: 8, 2: 16, 1: 32}.get(jnp.dtype(dtype).itemsize, 8)


def _gp_head_kernel(x_ref, w_ref, b_ref, o_ref):
    # x_ref: (tm, F)  features tile (full feature dim per block -> no K grid)
    # w_ref: (F, tn)  pre-transposed, O-padded weight tile
    # b_ref: (1, tn)  f32 bias row tile
    # o_ref: (tm, tn) output tile (lane-dense, written exactly once)
    acc = jnp.dot(x_ref[...], w_ref[...], preferred_element_type=jnp.float32)
    o_ref[...] = (acc + b_ref[...]).astype(o_ref.dtype)


def prepare_dkl_gp_head(weight, bias, *, param_dtype=None):
    """One-time (init-time) prep of the GP head parameters.

    Transposes the (O, F) weight to (F, O), zero-pads the output dim up to a
    lane multiple and casts to the operand dtype.  Hoisted out of the per-call
    forward so there are no per-step pad/transpose/astype HBM passes.
    """
    O, F = weight.shape
    Op = _round_up(max(O, 1), LANE)
    dt = param_dtype if param_dtype is not None else weight.dtype
    w_p = jnp.zeros((F, Op), dtype=dt).at[:, :O].set(weight.T.astype(dt))
    b_p = jnp.zeros((1, Op), dtype=jnp.float32).at[0, :O].set(
        bias.astype(jnp.float32))
    return w_p, b_p


def _gp_head(features, w_p, b_p, *, out_dim, use_pallas=None, tm_max=512):
    """features: (B, F); w_p: (F, Op) padded pre-transposed weight; b_p: (1, Op)."""
    B, F = features.shape
    Fw, Op = w_p.shape
    assert Fw == F and b_p.shape == (1, Op) and Op % LANE == 0 and out_dim <= Op

    if use_pallas is None:
        # Tiny heads are dominated by launch/DMA overhead; let XLA fuse a dot.
        use_pallas = (B * F * Op) >= (1 << 20)

    def _xla_fallback():
        out = jnp.dot(features, w_p[:, :out_dim],
                      preferred_element_type=jnp.float32) + b_p[0, :out_dim]
        return out.astype(features.dtype)

    if not use_pallas:
        return _xla_fallback()

    out_dtype = features.dtype
    esx = jnp.dtype(features.dtype).itemsize
    esw = jnp.dtype(w_p.dtype).itemsize
    eso = jnp.dtype(out_dtype).itemsize
    sub = _sublane_multiple(features.dtype)

    # N tile: 256 on v6e/v7x when the padded output dim allows it, else 128.
    tn = 256 if (_prefers_wide_tiles() and Op % 256 == 0) else LANE

    # Adaptive batch tile: as large as possible (amortizes ~0.35 us/grid step)
    # while balancing blocks so a ragged B never nearly doubles the work.
    n_m = pl.cdiv(B, tm_max)
    tm = _round_up(pl.cdiv(B, n_m), sub)

    phys = _physical_vmem_bytes()
    cap = max(phys - 8 * 1024 * 1024, 32 * 1024 * 1024)   # headroom below phys
    budget = (3 * cap) // 4

    def footprint(tm_):
        # double-buffered x / weight / bias input tiles + double-buffered out.
        return 2 * (tm_ * F * esx + F * tn * esw + tn * 4 + tm_ * tn * eso)

    while tm > sub and footprint(tm) > budget:
        tm = max(sub, _round_up(tm // 2, sub))

    if footprint(tm) > budget:
        # TODO(synk): pathologically large feature dim -> the (F, tn) weight
        # slab no longer fits VMEM; a K-tiled accumulating kernel would be
        # needed here.  Fall back to XLA's dot for that regime.
        return _xla_fallback()

    # No batch padding: OOB rows of the last M block are simply never written.
    grid = (pl.cdiv(B, tm), Op // tn)

    vmem_limit = int(min(cap, max(2 * footprint(tm), 16 * 1024 * 1024)))

    cost = pl.CostEstimate(
        flops=2 * B * F * Op,
        transcendentals=0,
        bytes_accessed=B * F * esx + F * Op * esw + Op * 4 + B * Op * eso,
    )

    out_p = pl.pallas_call(
        _gp_head_kernel,
        out_shape=jax.ShapeDtypeStruct((B, Op), out_dtype),
        grid=grid,
        in_specs=[
            pl.BlockSpec((tm, F), lambda i, j: (i, 0)),    # features, full K
            pl.BlockSpec((F, tn), lambda i, j: (0, j)),    # weight (F, O) tile
            pl.BlockSpec((1, tn), lambda i, j: (0, j)),    # bias row tile
        ],
        out_specs=pl.BlockSpec((tm, tn), lambda i, j: (i, j)),
        compiler_params=pltpu.CompilerParams(
            dimension_semantics=("parallel", "parallel"),
            vmem_limit_bytes=vmem_limit,
        ),
        cost_estimate=cost,
    )(features, w_p, b_p)

    return out_p[:, :out_dim] if out_dim != Op else out_p


def dkl_forward(x, w_p, b_p, *, out_dim, use_pallas=None):
    """DKLModel.forward: features = feature_extractor(x); res = gp_layer(features)."""
    # TODO(synk): feature_extractor is an injected backbone in the original
    # module; here it is identity/flatten.  A real backbone's (B, F) features
    # (ideally already bf16 on v6e/v7x) plug straight into the head kernel —
    # do NOT cast f32->bf16 in this wrapper (it would be an extra HBM pass).
    features = x.reshape(x.shape[0], -1)
    # TODO(synk): gp_layer is an injected GP output layer; it is represented
    # here by its linear predictive-mean head (features @ W^T + b).
    return _gp_head(features, w_p, b_p, out_dim=out_dim, use_pallas=use_pallas)


if __name__ == "__main__":
    # Spec-consistent small shapes: batch=8, features=32, output_dim=2.
    B, num_features, output_dim = 8, 32, 2

    key = jax.random.PRNGKey(0)
    k_x, k_w, k_b = jax.random.split(key, 3)

    x = jax.random.normal(k_x, (B, num_features), dtype=jnp.float32)

    # Deterministic nn.Linear-style init: U(-1/sqrt(fan_in), 1/sqrt(fan_in)).
    bound = 1.0 / math.sqrt(num_features)
    weight = jax.random.uniform(
        k_w, (output_dim, num_features), minval=-bound, maxval=bound,
        dtype=jnp.float32)
    bias = jax.random.uniform(
        k_b, (output_dim,), minval=-bound, maxval=bound, dtype=jnp.float32)

    # Parameter prep (transpose + lane padding + cast) hoisted to init time.
    w_p, b_p = prepare_dkl_gp_head(weight, bias)

    fwd = jax.jit(dkl_forward, static_argnames=("out_dim", "use_pallas"))

    # 1) Exercise the Pallas head kernel at the spec shapes.
    out = jax.block_until_ready(
        fwd(x, w_p, b_p, out_dim=output_dim, use_pallas=True))
    ref = x @ weight.T + bias
    assert out.shape == (B, output_dim)
    assert jnp.allclose(out, ref, atol=1e-5, rtol=1e-5)

    # 2) Default (auto) path: the tiny head picks the fused XLA dot fallback.
    out_auto = jax.block_until_ready(fwd(x, w_p, b_p, out_dim=output_dim))
    assert jnp.allclose(out_auto, ref, atol=1e-5, rtol=1e-5)

    # 3) Larger ragged case (un-aligned B/F/O) hits the Pallas path via the
    #    auto heuristic and exercises multi-block M with a masked partial
    #    last block plus output-dim padding — with no padding of x at all.
    B2, F2, O2 = 600, 300, 130
    k2x, k2w, k2b = jax.random.split(jax.random.PRNGKey(1), 3)
    x2 = jax.random.normal(k2x, (B2, F2), dtype=jnp.float32)
    w2 = jax.random.normal(k2w, (O2, F2), dtype=jnp.float32) * 0.05
    b2 = jax.random.normal(k2b, (O2,), dtype=jnp.float32)
    w2_p, b2_p = prepare_dkl_gp_head(w2, b2)
    out2 = jax.block_until_ready(fwd(x2, w2_p, b2_p, out_dim=O2))
    ref2 = x2 @ w2.T + b2
    assert out2.shape == (B2, O2)
    assert jnp.allclose(out2, ref2, atol=2e-3, rtol=2e-3)

    print("KERNEL_OK")
</pallas_src>

<mosaic_0001>
module attributes {stable_mosaic.version = 11 : i64} {
  func.func @_gp_head_kernel(%arg0: i32, %arg1: i32, %arg2: memref<8x32xf32, #tpu.memory_space<vmem>>, %arg3: memref<32x128xf32, #tpu.memory_space<vmem>>, %arg4: memref<1x128xf32, #tpu.memory_space<vmem>>, %arg5: memref<8x128xf32, #tpu.memory_space<vmem>>) attributes {dimension_semantics = [#tpu.dimension_semantics<parallel>, #tpu.dimension_semantics<parallel>], iteration_bounds = array<i64: 1, 1>, scalar_prefetch = 0 : i64, scratch_operands = 0 : i64, tpu.core_type = #tpu.core_type<tc>, window_params = [{transform_indices = @transform_0, window_bounds = array<i64: 8, 32>}, {transform_indices = @transform_1, window_bounds = array<i64: 32, 128>}, {transform_indices = @transform_2, window_bounds = array<i64: 1, 128>}, {transform_indices = @transform_3, window_bounds = array<i64: 8, 128>}]} {
    %c0 = arith.constant 0 : index
    %c0_0 = arith.constant 0 : index
    %0 = vector.load %arg2[%c0, %c0_0] : memref<8x32xf32, #tpu.memory_space<vmem>>, vector<8x32xf32>
    %c0_1 = arith.constant 0 : index
    %c0_2 = arith.constant 0 : index
    %1 = vector.load %arg3[%c0_1, %c0_2] : memref<32x128xf32, #tpu.memory_space<vmem>>, vector<32x128xf32>
    %cst = arith.constant dense<0.000000e+00> : vector<8x128xf32>
    %2 = tpu.matmul %0, %1, %cst {dimension_numbers = #tpu.dot_dimension_numbers<[1], [0], [0], [1], [0, 0, 1, 1], [], []>} : vector<8x32xf32>, vector<32x128xf32>, vector<8x128xf32> -> vector<8x128xf32>
    %c0_3 = arith.constant 0 : index
    %c0_4 = arith.constant 0 : index
    %3 = vector.load %arg4[%c0_3, %c0_4] : memref<1x128xf32, #tpu.memory_space<vmem>>, vector<1x128xf32>
    %4 = vector.broadcast %3 : vector<1x128xf32> to vector<8x128xf32>
    %5 = arith.addf %2, %4 : vector<8x128xf32>
    %c0_5 = arith.constant 0 : index
    %c0_6 = arith.constant 0 : index
    %6 = vector.load %arg5[%c0_5, %c0_6] : memref<8x128xf32, #tpu.memory_space<vmem>>, vector<8x128xf32>
    tpu.vector_store %arg5[%c0_5, %c0_6], %5 {strides = array<i32>} : memref<8x128xf32, #tpu.memory_space<vmem>>, vector<8x128xf32>,
    return
  }
  func.func @transform_0(%arg0: i32, %arg1: i32) -> (i32, i32) {
    %c0_i32 = arith.constant 0 : i32
    %c0_i32_0 = arith.constant 0 : i32
    return %arg0, %c0_i32 : i32, i32
  }
  func.func @transform_1(%arg0: i32, %arg1: i32) -> (i32, i32) {
    %c0_i32 = arith.constant 0 : i32
    %c0_i32_0 = arith.constant 0 : i32
    return %c0_i32, %arg1 : i32, i32
  }
  func.func @transform_2(%arg0: i32, %arg1: i32) -> (i32, i32) {
    %c0_i32 = arith.constant 0 : i32
    %c0_i32_0 = arith.constant 0 : i32
    return %c0_i32, %arg1 : i32, i32
  }
  func.func @transform_3(%arg0: i32, %arg1: i32) -> (i32, i32) {
    %c0_i32 = arith.constant 0 : i32
    return %arg0, %arg1 : i32, i32
  }
}

</mosaic_0001>

<llo_original>
// kernel: dkl_forward.1
$region0: #{dkl_forward.1}
  #allocation0 [shape = 'u32[]', space=smem, size = 0x4, offset = 0x4, fixed_abs, tag = 'smem constant byte address 0x4 - core index']
  #allocation1 [shape = 'u32[144,128]{1,0:T(1,128)}', space=vmem, size = 0x12000, scoped, tag = 'internal scratch']
  %s0 = inlined_call_operand.hbm [shape: f32[8,32], index: 0, kind: input, shape index: {}]
  %s1 = inlined_call_operand.hbm [shape: f32[32,128], index: 1, kind: input, shape index: {}]
  %s2 = inlined_call_operand.vmem [shape: f32[1,128], index: 2, kind: input, shape index: {}]
  %s3 = inlined_call_operand.vmem [shape: f32[8,128], index: 3, kind: output, shape index: {}]
  %s4 = sld [smem:[#allocation0]]
  $region30: #{dkl_forward.1} parent=0
    _
  %s6 = ssub.s32 1, %s4
  %s7 = scalar_select 0, %s6, %s4
  $region1: #{dkl_forward.1} parent=0
    #allocation2 [shape = 'u8[4096]{0}', space=vmem, size = 0x1000, scoped, tag = 'input window, operand 0, single buffered']
    #allocation3 [shape = 's32[1]{0}', space=sflag, size = 0x4, scoped, tag = 'scoped memory for dkl_forward.1']
    #allocation4 [shape = 'u8[16384]{0}', space=vmem, size = 0x4000, scoped, tag = 'input window, operand 1, single buffered']
    #allocation5 [shape = 's32[1]{0}', space=sflag, size = 0x4, scoped, tag = 'scoped memory for dkl_forward.1']
    %8 = vsyncpa [#allocation3], 0
    %9 = vsyncpa [#allocation5], 0
    // Predicated region
    $region2: #{dkl_forward.1} parent=1 // pred_check
      _
    $region3: #{dkl_forward.1} parent=1 // pred_check_branch
      %11 = sbr.rel (0) target = $region5
    $region4: #{dkl_forward.1} parent=1 // pred_region
      %s13 = ssub.s32 128, 128
      %14 = vsyncadd [#allocation3], %s13
      %s16 = sshll.u32 [#allocation2], 4
      %s17 = int_to_ptr.vmem [resolvable:$true] %s16
      %19 = dma.hbm_to_vmem [thread:$0]  %s0, 128, %s17, [#allocation3]
    $region5: #{dkl_forward.1} parent=1 // pred_fallthru
      _
    // Predicated region
    $region6: #{dkl_forward.1} parent=1 // pred_check
      _
    $region7: #{dkl_forward.1} parent=1 // pred_check_branch
      %21 = sbr.rel (0) target = $region9
    $region8: #{dkl_forward.1} parent=1 // pred_region
      %s23 = ssub.s32 512, 512
      %24 = vsyncadd [#allocation5], %s23
      %s25 = sshll.u32 [#allocation4], 4
      %s26 = int_to_ptr.vmem [resolvable:$true] %s25
      %31 = dma.hbm_to_vmem [thread:$0]  %s1, 512, %s26, [#allocation5], 128, 128, 8
    $region9: #{dkl_forward.1} parent=1 // pred_fallthru
      _
    // Predicated region
    $region10: #{dkl_forward.1} parent=1 // pred_check
      _
    $region11: #{dkl_forward.1} parent=1 // pred_check_branch
      %33 = sbr.rel (0) target = $region13
    $region12: #{dkl_forward.1} parent=1 // pred_region
      _
    $region13: #{dkl_forward.1} parent=1 // pred_fallthru
      _
    // Predicated region
    $region14: #{dkl_forward.1} parent=1 // pred_check
      _
    $region15: #{dkl_forward.1} parent=1 // pred_check_branch
      %35 = sbr.rel (0) target = $region17
    $region16: #{dkl_forward.1} parent=1 // pred_region
      %36 = dma.done [#allocation3], 128
    $region17: #{dkl_forward.1} parent=1 // pred_fallthru
      _
    // Predicated region
    $region18: #{dkl_forward.1} parent=1 // pred_check
      _
    $region19: #{dkl_forward.1} parent=1 // pred_check_branch
      %38 = sbr.rel (0) target = $region21
    $region20: #{dkl_forward.1} parent=1 // pred_region
      %39 = dma.done [#allocation5], 512
    $region21: #{dkl_forward.1} parent=1 // pred_fallthru
      _
    %v40 = vld [vmem:[#allocation2] sm:$0xff]
    %v41 = vld [vmem:[#allocation4] sm:$0xff]
    %v42 = vld [vmem:[#allocation4 + $0x8] sm:$0xff]
    %v43 = vld [vmem:[#allocation4 + $0x10] sm:$0xff]
    %v44 = vld [vmem:[#allocation4 + $0x18] sm:$0xff]
    %v45 = vld [vmem:[%s2] sm:$0x1]
    %v47 = vlaneseq
    %v48 = vshrl.u32 %v47, 7
    %v49 = vsub.s32 0, %v48
    %v50 = vrot.slane %v45, %v49
    %vm52 = vcmask 261120
    %v54 = vsel %vm52, %v40, 0
    %56 = vmatprep.subr.mxu0 0.0
    %57 = vmatpush1.msra.mxu0 %v41
    %58 = vmatprep.subr.mxu0 0.0
    %59 = vmatpush1.msra.mxu0 %v42
    %60 = vmatprep.subr.mxu0 0.0
    %61 = vmatpush1.msra.mxu0 %v43
    %62 = vmatprep.subr.mxu0 0.0
    %63 = vmatpush1.msra.mxu0 %v44
    %64 = vmatprep.subr.mxu0 0.0
    %65 = vmatpush1.msra.mxu0 0.0
    %66 = vmatprep.subr.mxu0 0.0
    %67 = vmatpush1.msra.mxu0 0.0
    %68 = vmatprep.subr.mxu0 0.0
    %69 = vmatpush1.msra.mxu0 0.0
    %70 = vmatprep.subr.mxu0 0.0
    %71 = vmatpush1.msra.mxu0 0.0
    %72 = vmatprep.subr.mxu0 0.0
    %73 = vmatpush1.msra.mxu0 0.0
    %74 = vmatprep.subr.mxu0 0.0
    %75 = vmatpush1.msra.mxu0 0.0
    %76 = vmatprep.subr.mxu0 0.0
    %77 = vmatpush1.msra.mxu0 0.0
    %78 = vmatprep.subr.mxu0 0.0
    %79 = vmatpush1.msra.mxu0 0.0
    %80 = vmatprep.subr.mxu0 0.0
    %81 = vmatpush1.msra.mxu0 0.0
    %82 = vmatprep.subr.mxu0 0.0
    %83 = vmatpush1.msra.mxu0 0.0
    %84 = vmatprep.subr.mxu0 0.0
    %85 = vmatpush1.msra.mxu0 0.0
    %86 = vmatprep.subr.mxu0 0.0
    %87 = vmatpush1.msra.mxu0 0.0
    %88 = vmatprep.subr.mxu0 0.0
    %89 = vmatpush1.msra.mxu0 0.0
    %90 = vmatprep.subr.mxu0 0.0
    %91 = vmatpush1.msra.mxu0 0.0
    %92 = vmatprep.subr.mxu0 0.0
    %93 = vmatpush1.msra.mxu0 0.0
    %94 = vmatprep.subr.mxu0 0.0
    %95 = vmatpush1.msra.mxu0 0.0
    %96 = vmatprep.subr.mxu0 0.0
    %97 = vmatpush1.msra.mxu0 0.0
    %98 = vmatprep.subr.mxu0 0.0
    %99 = vmatpush1.msra.mxu0 0.0
    %100 = vmatprep.subr.mxu0 0.0
    %101 = vmatpush1.msra.mxu0 0.0
    %102 = vmatprep.subr.mxu0 0.0
    %103 = vmatpush1.msra.mxu0 0.0
    %104 = vmatprep.subr.mxu0 0.0
    %105 = vmatpush1.msra.mxu0 0.0
    %106 = vmatprep.subr.mxu0 0.0
    %107 = vmatpush1.msra.mxu0 0.0
    %108 = vmatprep.subr.mxu0 0.0
    %109 = vmatpush1.msra.mxu0 0.0
    %110 = vmatprep.subr.mxu0 0.0
    %111 = vmatpush1.msra.mxu0 0.0
    %112 = vmatprep.subr.mxu0 0.0
    %113 = vmatpush1.msra.mxu0 0.0
    %114 = vmatprep.subr.mxu0 0.0
    %115 = vmatpush1.msra.mxu0 0.0
    %116 = vmatprep.subr.mxu0 0.0
    %117 = vmatpush1.msra.mxu0 0.0
    %118 = vmatprep.subr.mxu0 0.0
    %119 = vmatpush1.msra.mxu0 0.0
    %120 = vmatprep.mubr.f32.mxu0 0.0
    %121 = vmatmul.mubr.f32.gmra.mrb[0].mxu0 %v54
    %v122 = vpop.f32.mrb[0].mxu0
    %v123 = vadd.f32 %v50, %v122
    %v124 = vpop.f32.mrb[0].mxu0
    %125 = vdwg.mxu0
    %126 = vst [vmem:[%s3] sm:$0xff] %v123
    // Predicated region
    $region22: #{dkl_forward.1} parent=1 // pred_check
      _
    $region23: #{dkl_forward.1} parent=1 // pred_check_branch
      %128 = sbr.rel (0) target = $region25
    $region24: #{dkl_forward.1} parent=1 // pred_region
      _
    $region25: #{dkl_forward.1} parent=1 // pred_fallthru
      _
    // Predicated region
    $region26: #{dkl_forward.1} parent=1 // pred_check
      _
    $region27: #{dkl_forward.1} parent=1 // pred_check_branch
      %130 = sbr.rel (0) target = $region29
    $region28: #{dkl_forward.1} parent=1 // pred_region
      _
    $region29: #{dkl_forward.1} parent=1 // pred_fallthru
      _
    %131 = vsyncpa [#allocation3], 1
    %132 = vsyncpa [#allocation5], 1

</llo_original>
